<compile_context>
chip_gen: v5e
topology: v5e:2x2
jax: 0.10.0
libtpu: 0.0.40
codegen_flags: <defaults>
</compile_context>

<pallas_src>
import jax
import jax.numpy as jnp
from jax.experimental import pallas as pl
from jax.experimental.pallas import tpu as pltpu

IN_DIM = 2 + 6 * 2 * 2   # 26
HIDDEN = 128             # filter_size
OUT_DIM = 3


def mlp_kernel(x_ref, w1_ref, b1_ref, w2_ref, b2_ref, w3_ref, b3_ref, o_ref):
    # Entire fused hot path (3 matmuls + activations) runs on-chip per batch
    # tile. Weights are resident (constant index_map); only x/o stream.
    mm_dtype = w1_ref.dtype  # bf16 by default, f32 if requested

    # Operand cast happens here, on the VMEM tile (VALU is not the binding
    # slot) — never as a separate wrapper-side HBM pass.
    x = x_ref[...].astype(mm_dtype)

    h1 = jnp.dot(x, w1_ref[...], preferred_element_type=jnp.float32) + b1_ref[...]
    h1 = jnp.maximum(h1, 0.0)

    h2 = jnp.dot(h1.astype(mm_dtype), w2_ref[...],
                 preferred_element_type=jnp.float32) + b2_ref[...]
    h2 = jnp.maximum(h2, 0.0)

    logits = jnp.dot(h2.astype(mm_dtype), w3_ref[...],
                     preferred_element_type=jnp.float32) + b3_ref[...]
    o_ref[...] = jax.nn.sigmoid(logits).astype(o_ref.dtype)


def model_2d_pallas(x, params, *, batch_tile=2048, matmul_dtype=jnp.bfloat16,
                    vmem_limit_bytes=None):
    """Fused 3-layer MLP forward (Linear/ReLU/Linear/ReLU/Linear/Sigmoid).

    batch_tile:   rows per grid step — the primary tuning knob. 2048 amortizes
                  the ~0.35 us/step pipeline overhead; sweep 1024-4096. For
                  >= ~4096 f32 rows on v5e raise vmem_limit_bytes (16 MiB
                  default scoped limit); on v7x keep N/batch_tile >= 2 so both
                  TensorCores get work.
    matmul_dtype: bf16 by default on ALL generations (v5e MXU is bf16-native;
                  f32 matmuls decompose into extra MXU passes). Accumulation,
                  bias add, ReLU and sigmoid stay f32. Use jnp.float32 for
                  tight-tolerance verification.
    """
    w1, b1, w2, b2, w3, b3 = params
    n = x.shape[0]

    # Don't allocate a VMEM tile wildly larger than the whole problem for
    # small batches (keep second-last block dim a multiple of 8).
    batch_tile = min(batch_tile, max(8, -(-n // 8) * 8))

    # No jnp.pad: Pallas handles the ragged last block itself. Garbage rows in
    # the tail of the last input tile only produce output rows that are never
    # written back, so correctness is unaffected.
    grid = (pl.cdiv(n, batch_tile),)

    # One-time cast of the (tiny, weight-resident) matmul operands only.
    w1c = w1.astype(matmul_dtype)
    w2c = w2.astype(matmul_dtype)
    w3c = w3.astype(matmul_dtype)

    full = lambda shape: pl.BlockSpec(shape, lambda i: (0,) * len(shape))

    return pl.pallas_call(
        mlp_kernel,
        out_shape=jax.ShapeDtypeStruct((n, OUT_DIM), jnp.float32),
        grid_spec=pltpu.PrefetchScalarGridSpec(
            num_scalar_prefetch=0,
            grid=grid,
            in_specs=[
                pl.BlockSpec((batch_tile, IN_DIM), lambda i: (i, 0)),  # x tile
                full((IN_DIM, HIDDEN)),   # w1 (resident)
                full((1, HIDDEN)),        # b1
                full((HIDDEN, HIDDEN)),   # w2
                full((1, HIDDEN)),        # b2
                full((HIDDEN, OUT_DIM)),  # w3
                full((1, OUT_DIM)),       # b3
            ],
            out_specs=pl.BlockSpec((batch_tile, OUT_DIM), lambda i: (i, 0)),
        ),
        compiler_params=pltpu.CompilerParams(
            dimension_semantics=("parallel",),       # shards grid across v7x TCs
            vmem_limit_bytes=vmem_limit_bytes),
    )(x, w1c, b1, w2c, b2, w3c, b3)


def init_params(key):
    """Deterministic init mimicking nn.Linear's U(-1/sqrt(fan_in), 1/sqrt(fan_in))."""
    ks = jax.random.split(key, 6)

    def linear(kw, kb, fan_in, fan_out):
        bound = 1.0 / jnp.sqrt(fan_in)
        w = jax.random.uniform(kw, (fan_in, fan_out), jnp.float32, -bound, bound)
        b = jax.random.uniform(kb, (1, fan_out), jnp.float32, -bound, bound)
        return w, b

    w1, b1 = linear(ks[0], ks[1], IN_DIM, HIDDEN)
    w2, b2 = linear(ks[2], ks[3], HIDDEN, HIDDEN)
    w3, b3 = linear(ks[4], ks[5], HIDDEN, OUT_DIM)
    return (w1, b1, w2, b2, w3, b3)


def model_2d_ref(x, params):
    w1, b1, w2, b2, w3, b3 = params
    h1 = jax.nn.relu(x @ w1 + b1)
    h2 = jax.nn.relu(h1 @ w2 + b2)
    return jax.nn.sigmoid(h2 @ w3 + b3)


if __name__ == "__main__":
    key = jax.random.PRNGKey(0)
    kx, kp = jax.random.split(key)
    params = init_params(kp)

    # Small batch of positional-encoded 2D coordinates; N is NOT a multiple of
    # the batch tile, exercising the ragged-last-block path (no wrapper pad).
    N = 300
    x = jax.random.normal(kx, (N, IN_DIM), jnp.float32)
    ref = model_2d_ref(x, params)

    # Default path: bf16 MXU operands (fast on v5e/v6e/v7x), single ragged tile.
    out = jax.block_until_ready(model_2d_pallas(x, params))
    assert out.shape == (N, OUT_DIM)
    assert jnp.allclose(out, ref, atol=2e-2, rtol=2e-2), "bf16 mismatch vs reference"

    # f32-operand path with a multi-step grid and ragged tail — tight tolerance.
    out_f32 = jax.block_until_ready(
        model_2d_pallas(x, params, batch_tile=128, matmul_dtype=jnp.float32))
    assert out_f32.shape == (N, OUT_DIM)
    assert jnp.allclose(out_f32, ref, atol=1e-5, rtol=1e-5), "f32 mismatch vs reference"

    print("KERNEL_OK")
</pallas_src>

<mosaic_0001>
module attributes {stable_mosaic.version = 11 : i64} {
  func.func @mlp_kernel(%arg0: i32, %arg1: memref<304x26xf32, #tpu.memory_space<vmem>>, %arg2: memref<26x128xbf16, #tpu.memory_space<vmem>>, %arg3: memref<1x128xf32, #tpu.memory_space<vmem>>, %arg4: memref<128x128xbf16, #tpu.memory_space<vmem>>, %arg5: memref<1x128xf32, #tpu.memory_space<vmem>>, %arg6: memref<128x3xbf16, #tpu.memory_space<vmem>>, %arg7: memref<1x3xf32, #tpu.memory_space<vmem>>, %arg8: memref<304x3xf32, #tpu.memory_space<vmem>>) attributes {dimension_semantics = [#tpu.dimension_semantics<parallel>], iteration_bounds = array<i64: 1>, scalar_prefetch = 0 : i64, scratch_operands = 0 : i64, tpu.core_type = #tpu.core_type<tc>, window_params = [{transform_indices = @transform_0, window_bounds = array<i64: 304, 26>}, {pipeline_mode = #tpu.pipeline_mode<synchronous>, transform_indices = @transform_1, window_bounds = array<i64: 26, 128>}, {pipeline_mode = #tpu.pipeline_mode<synchronous>, transform_indices = @transform_2, window_bounds = array<i64: 1, 128>}, {pipeline_mode = #tpu.pipeline_mode<synchronous>, transform_indices = @transform_3, window_bounds = array<i64: 128, 128>}, {pipeline_mode = #tpu.pipeline_mode<synchronous>, transform_indices = @transform_4, window_bounds = array<i64: 1, 128>}, {pipeline_mode = #tpu.pipeline_mode<synchronous>, transform_indices = @transform_5, window_bounds = array<i64: 128, 3>}, {pipeline_mode = #tpu.pipeline_mode<synchronous>, transform_indices = @transform_6, window_bounds = array<i64: 1, 3>}, {transform_indices = @transform_7, window_bounds = array<i64: 304, 3>}]} {
    %c0 = arith.constant 0 : index
    %c0_0 = arith.constant 0 : index
    %0 = vector.load %arg1[%c0, %c0_0] : memref<304x26xf32, #tpu.memory_space<vmem>>, vector<304x26xf32>
    %1 = arith.truncf %0 : vector<304x26xf32> to vector<304x26xbf16>
    %c0_1 = arith.constant 0 : index
    %c0_2 = arith.constant 0 : index
    %2 = vector.load %arg2[%c0_1, %c0_2] : memref<26x128xbf16, #tpu.memory_space<vmem>>, vector<26x128xbf16>
    %cst = arith.constant dense<0.000000e+00> : vector<304x128xf32>
    %3 = tpu.matmul %1, %2, %cst {dimension_numbers = #tpu.dot_dimension_numbers<[1], [0], [0], [1], [0, 0, 1, 1], [], []>} : vector<304x26xbf16>, vector<26x128xbf16>, vector<304x128xf32> -> vector<304x128xf32>
    %c0_3 = arith.constant 0 : index
    %c0_4 = arith.constant 0 : index
    %4 = vector.load %arg3[%c0_3, %c0_4] : memref<1x128xf32, #tpu.memory_space<vmem>>, vector<1x128xf32>
    %5 = vector.broadcast %4 : vector<1x128xf32> to vector<304x128xf32>
    %6 = arith.addf %3, %5 : vector<304x128xf32>
    %cst_5 = arith.constant 0.000000e+00 : f32
    %7 = vector.broadcast %cst_5 : f32 to vector<304x128xf32>
    %8 = arith.maximumf %6, %7 : vector<304x128xf32>
    %9 = arith.truncf %8 : vector<304x128xf32> to vector<304x128xbf16>
    %c0_6 = arith.constant 0 : index
    %c0_7 = arith.constant 0 : index
    %10 = vector.load %arg4[%c0_6, %c0_7] : memref<128x128xbf16, #tpu.memory_space<vmem>>, vector<128x128xbf16>
    %cst_8 = arith.constant dense<0.000000e+00> : vector<304x128xf32>
    %11 = tpu.matmul %9, %10, %cst_8 {dimension_numbers = #tpu.dot_dimension_numbers<[1], [0], [0], [1], [0, 0, 1, 1], [], []>} : vector<304x128xbf16>, vector<128x128xbf16>, vector<304x128xf32> -> vector<304x128xf32>
    %c0_9 = arith.constant 0 : index
    %c0_10 = arith.constant 0 : index
    %12 = vector.load %arg5[%c0_9, %c0_10] : memref<1x128xf32, #tpu.memory_space<vmem>>, vector<1x128xf32>
    %13 = vector.broadcast %12 : vector<1x128xf32> to vector<304x128xf32>
    %14 = arith.addf %11, %13 : vector<304x128xf32>
    %cst_11 = arith.constant 0.000000e+00 : f32
    %15 = vector.broadcast %cst_11 : f32 to vector<304x128xf32>
    %16 = arith.maximumf %14, %15 : vector<304x128xf32>
    %17 = arith.truncf %16 : vector<304x128xf32> to vector<304x128xbf16>
    %c0_12 = arith.constant 0 : index
    %c0_13 = arith.constant 0 : index
    %18 = vector.load %arg6[%c0_12, %c0_13] : memref<128x3xbf16, #tpu.memory_space<vmem>>, vector<128x3xbf16>
    %cst_14 = arith.constant dense<0.000000e+00> : vector<304x3xf32>
    %19 = tpu.matmul %17, %18, %cst_14 {dimension_numbers = #tpu.dot_dimension_numbers<[1], [0], [0], [1], [0, 0, 1, 1], [], []>} : vector<304x128xbf16>, vector<128x3xbf16>, vector<304x3xf32> -> vector<304x3xf32>
    %c0_15 = arith.constant 0 : index
    %c0_16 = arith.constant 0 : index
    %20 = vector.load %arg7[%c0_15, %c0_16] : memref<1x3xf32, #tpu.memory_space<vmem>>, vector<1x3xf32>
    %21 = vector.broadcast %20 : vector<1x3xf32> to vector<304x3xf32>
    %22 = arith.addf %19, %21 : vector<304x3xf32>
    %23 = arith.negf %22 : vector<304x3xf32>
    %24 = math.exp %23 : vector<304x3xf32>
    %cst_17 = arith.constant 1.000000e+00 : f32
    %25 = vector.broadcast %cst_17 : f32 to vector<304x3xf32>
    %26 = arith.addf %25, %24 : vector<304x3xf32>
    %27 = arith.divf %25, %26 : vector<304x3xf32>
    %c0_18 = arith.constant 0 : index
    %c0_19 = arith.constant 0 : index
    %28 = vector.load %arg8[%c0_18, %c0_19] : memref<304x3xf32, #tpu.memory_space<vmem>>, vector<304x3xf32>
    tpu.vector_store %arg8[%c0_18, %c0_19], %27 {strides = array<i32>} : memref<304x3xf32, #tpu.memory_space<vmem>>, vector<304x3xf32>,
    return
  }
  func.func @transform_0(%arg0: i32) -> (i32, i32) {
    %c0_i32 = arith.constant 0 : i32
    %c0_i32_0 = arith.constant 0 : i32
    return %arg0, %c0_i32 : i32, i32
  }
  func.func @transform_1(%arg0: i32) -> (i32, i32) {
    %c0_i32 = arith.constant 0 : i32
    %c0_i32_0 = arith.constant 0 : i32
    %c0_i32_1 = arith.constant 0 : i32
    return %c0_i32, %c0_i32_0 : i32, i32
  }
  func.func @transform_2(%arg0: i32) -> (i32, i32) {
    %c0_i32 = arith.constant 0 : i32
    %c0_i32_0 = arith.constant 0 : i32
    %c0_i32_1 = arith.constant 0 : i32
    return %c0_i32, %c0_i32_0 : i32, i32
  }
  func.func @transform_3(%arg0: i32) -> (i32, i32) {
    %c0_i32 = arith.constant 0 : i32
    %c0_i32_0 = arith.constant 0 : i32
    %c0_i32_1 = arith.constant 0 : i32
    return %c0_i32, %c0_i32_0 : i32, i32
  }
  func.func @transform_4(%arg0: i32) -> (i32, i32) {
    %c0_i32 = arith.constant 0 : i32
    %c0_i32_0 = arith.constant 0 : i32
    %c0_i32_1 = arith.constant 0 : i32
    return %c0_i32, %c0_i32_0 : i32, i32
  }
  func.func @transform_5(%arg0: i32) -> (i32, i32) {
    %c0_i32 = arith.constant 0 : i32
    %c0_i32_0 = arith.constant 0 : i32
    %c0_i32_1 = arith.constant 0 : i32
    return %c0_i32, %c0_i32_0 : i32, i32
  }
  func.func @transform_6(%arg0: i32) -> (i32, i32) {
    %c0_i32 = arith.constant 0 : i32
    %c0_i32_0 = arith.constant 0 : i32
    %c0_i32_1 = arith.constant 0 : i32
    return %c0_i32, %c0_i32_0 : i32, i32
  }
  func.func @transform_7(%arg0: i32) -> (i32, i32) {
    %c0_i32 = arith.constant 0 : i32
    %c0_i32_0 = arith.constant 0 : i32
    return %arg0, %c0_i32 : i32, i32
  }
}

</mosaic_0001>

<llo_original>
// kernel: tpu_custom_call.1
$region0: #{tpu_custom_call.1}
  #allocation0 [shape = 'u32[]', space=smem, size = 0x4, offset = 0x4, fixed_abs, tag = 'smem constant byte address 0x4 - core index']
  #allocation1 [shape = 'u32[72,128]{1,0:T(1,128)}', space=vmem, size = 0x9000, scoped, tag = 'internal scratch']
  %s0 = inlined_call_operand.vmem [shape: f32[300,26], index: 0, kind: input, shape index: {}]
  %s1 = inlined_call_operand.vmem [shape: bf16[26,128], index: 1, kind: input, shape index: {}]
  %s2 = inlined_call_operand.vmem [shape: f32[1,128], index: 2, kind: input, shape index: {}]
  %s3 = inlined_call_operand.vmem [shape: bf16[128,128], index: 3, kind: input, shape index: {}]
  %s4 = inlined_call_operand.vmem [shape: f32[1,128], index: 4, kind: input, shape index: {}]
  %s5 = inlined_call_operand.vmem [shape: bf16[128,3], index: 5, kind: input, shape index: {}]
  %s6 = inlined_call_operand.vmem [shape: f32[1,3], index: 6, kind: input, shape index: {}]
  %s7 = inlined_call_operand.vmem [shape: f32[300,3], index: 7, kind: output, shape index: {}]
  %s8 = sld [smem:[#allocation0]]
  $region38: #{tpu_custom_call.1} parent=0
    _
  %s10 = ssub.s32 1, %s8
  %s11 = scalar_select 0, %s10, %s8
  // Predicated region
  $region2: #{tpu_custom_call.1} parent=0 // pred_check
    _
  $region3: #{tpu_custom_call.1} parent=0 // pred_check_branch
    %13 = sbr.rel (0) target = $region5
  $region4: #{tpu_custom_call.1} parent=0 // pred_region
    _
  $region5: #{tpu_custom_call.1} parent=0 // pred_fallthru
    _
  // Predicated region
  $region6: #{tpu_custom_call.1} parent=0 // pred_check
    _
  $region7: #{tpu_custom_call.1} parent=0 // pred_check_branch
    %15 = sbr.rel (0) target = $region9
  $region8: #{tpu_custom_call.1} parent=0 // pred_region
    _
  $region9: #{tpu_custom_call.1} parent=0 // pred_fallthru
    _
  // Predicated region
  $region10: #{tpu_custom_call.1} parent=0 // pred_check
    _
  $region11: #{tpu_custom_call.1} parent=0 // pred_check_branch
    %17 = sbr.rel (0) target = $region13
  $region12: #{tpu_custom_call.1} parent=0 // pred_region
    _
  $region13: #{tpu_custom_call.1} parent=0 // pred_fallthru
    _
  // Predicated region
  $region14: #{tpu_custom_call.1} parent=0 // pred_check
    _
  $region15: #{tpu_custom_call.1} parent=0 // pred_check_branch
    %19 = sbr.rel (0) target = $region17
  $region16: #{tpu_custom_call.1} parent=0 // pred_region
    _
  $region17: #{tpu_custom_call.1} parent=0 // pred_fallthru
    _
  // Predicated region
  $region18: #{tpu_custom_call.1} parent=0 // pred_check
    _
  $region19: #{tpu_custom_call.1} parent=0 // pred_check_branch
    %21 = sbr.rel (0) target = $region21
  $region20: #{tpu_custom_call.1} parent=0 // pred_region
    _
  $region21: #{tpu_custom_call.1} parent=0 // pred_fallthru
    _
  // Predicated region
  $region22: #{tpu_custom_call.1} parent=0 // pred_check
    _
  $region23: #{tpu_custom_call.1} parent=0 // pred_check_branch
    %23 = sbr.rel (0) target = $region25
  $region24: #{tpu_custom_call.1} parent=0 // pred_region
    _
  $region25: #{tpu_custom_call.1} parent=0 // pred_fallthru
    _
  // Predicated region
  $region26: #{tpu_custom_call.1} parent=0 // pred_check
    _
  $region27: #{tpu_custom_call.1} parent=0 // pred_check_branch
    %25 = sbr.rel (0) target = $region29
  $region28: #{tpu_custom_call.1} parent=0 // pred_region
    _
  $region29: #{tpu_custom_call.1} parent=0 // pred_fallthru
    _
  %v27 = vld [vmem:[%s0] sm:$0xff]
  %v28 = vld [vmem:[%s0 + $0x8] sm:$0xff]
  %v29 = vld [vmem:[%s0 + $0x10] sm:$0xff]
  %v30 = vld [vmem:[%s0 + $0x18] sm:$0xff]
  %v31 = vld [vmem:[%s0 + $0x20] sm:$0xff]
  %v32 = vld [vmem:[%s0 + $0x28] sm:$0xff]
  %v33 = vld [vmem:[%s0 + $0x30] sm:$0xff]
  %v34 = vld [vmem:[%s0 + $0x38] sm:$0xff]
  %v35 = vld [vmem:[%s0 + $0x40] sm:$0xff]
  %v36 = vld [vmem:[%s0 + $0x48] sm:$0xff]
  %v37 = vld [vmem:[%s0 + $0x50] sm:$0xff]
  %v38 = vld [vmem:[%s0 + $0x58] sm:$0xff]
  %v39 = vld [vmem:[%s0 + $0x60] sm:$0xff]
  %v40 = vld [vmem:[%s0 + $0x68] sm:$0xff]
  %v41 = vld [vmem:[%s0 + $0x70] sm:$0xff]
  %v42 = vld [vmem:[%s0 + $0x78] sm:$0xff]
  %v43 = vld [vmem:[%s0 + $0x80] sm:$0xff]
  %v44 = vld [vmem:[%s0 + $0x88] sm:$0xff]
  %v45 = vld [vmem:[%s0 + $0x90] sm:$0xff]
  %v46 = vld [vmem:[%s0 + $0x98] sm:$0xff]
  %v47 = vld [vmem:[%s0 + $0xa0] sm:$0xff]
  %v48 = vld [vmem:[%s0 + $0xa8] sm:$0xff]
  %v49 = vld [vmem:[%s0 + $0xb0] sm:$0xff]
  %v50 = vld [vmem:[%s0 + $0xb8] sm:$0xff]
  %v51 = vld [vmem:[%s0 + $0xc0] sm:$0xff]
  %v52 = vld [vmem:[%s0 + $0xc8] sm:$0xff]
  %v53 = vld [vmem:[%s0 + $0xd0] sm:$0xff]
  %v54 = vld [vmem:[%s0 + $0xd8] sm:$0xff]
  %v55 = vld [vmem:[%s0 + $0xe0] sm:$0xff]
  %v56 = vld [vmem:[%s0 + $0xe8] sm:$0xff]
  %v57 = vld [vmem:[%s0 + $0xf0] sm:$0xff]
  %v58 = vld [vmem:[%s0 + $0xf8] sm:$0xff]
  %v59 = vld [vmem:[%s0 + $0x100] sm:$0xff]
  %v60 = vld [vmem:[%s0 + $0x108] sm:$0xff]
  %v61 = vld [vmem:[%s0 + $0x110] sm:$0xff]
  %v62 = vld [vmem:[%s0 + $0x118] sm:$0xff]
  %v63 = vld [vmem:[%s0 + $0x120] sm:$0xff]
  %v64 = vld [vmem:[%s0 + $0x128] sm:$0xff]
  %v65 = vpack.c.bf16 %v28, %v27
  %v66 = vpack.c.bf16 %v30, %v29
  %v67 = vpack.c.bf16 %v32, %v31
  %v68 = vpack.c.bf16 %v34, %v33
  %v69 = vpack.c.bf16 %v36, %v35
  %v70 = vpack.c.bf16 %v38, %v37
  %v71 = vpack.c.bf16 %v40, %v39
  %v72 = vpack.c.bf16 %v42, %v41
  %v73 = vpack.c.bf16 %v44, %v43
  %v74 = vpack.c.bf16 %v46, %v45
  %v75 = vpack.c.bf16 %v48, %v47
  %v76 = vpack.c.bf16 %v50, %v49
  %v77 = vpack.c.bf16 %v52, %v51
  %v78 = vpack.c.bf16 %v54, %v53
  %v79 = vpack.c.bf16 %v56, %v55
  %v80 = vpack.c.bf16 %v58, %v57
  %v81 = vpack.c.bf16 %v60, %v59
  %v82 = vpack.c.bf16 %v62, %v61
  %v83 = vpack.c.bf16 %v64, %v63
  %v84 = vld [vmem:[%s1] sm:$0xf]
  %v85 = vld [vmem:[%s1 + $0x4] sm:$0xf]
  %v86 = vld [vmem:[%s1 + $0x8] sm:$0xf]
  %v87 = vld [vmem:[%s1 + $0xc] sm:$0x1]
  %v88 = vld [vmem:[%s2] sm:$0x1]
  %v90 = vperm.slane %v88, 0
  %v96 = vunpack.c.l.b16 %v84
  %v97 = vunpack.c.l.b16 %v85
  %v98 = vunpack.c.l.b16 %v86
  %v99 = vunpack.c.l.b16 %v87
  %v100 = vpack.c.b16 %v97, %v96
  %v101 = vpack.c.b16 %v99, %v98
  %vm103 = vcmask 211968
  %v105 = vsel %vm103, %v65, 0
  %v108 = vsel %vm103, %v66, 0
  %v111 = vsel %vm103, %v67, 0
  %v114 = vsel %vm103, %v68, 0
  %v117 = vsel %vm103, %v69, 0
  %v120 = vsel %vm103, %v70, 0
  %v123 = vsel %vm103, %v71, 0
  %v126 = vsel %vm103, %v72, 0
  %v129 = vsel %vm103, %v73, 0
  %v132 = vsel %vm103, %v74, 0
  %v135 = vsel %vm103, %v75, 0
  %v138 = vsel %vm103, %v76, 0
  %v141 = vsel %vm103, %v77, 0
  %v144 = vsel %vm103, %v78, 0
  %v147 = vsel %vm103, %v79, 0
  %v150 = vsel %vm103, %v80, 0
  %v153 = vsel %vm103, %v81, 0
  %v156 = vsel %vm103, %v82, 0
  %v159 = vsel %vm103, %v83, 0
  %vm161 = vcmask 1044480
  %v163 = vsel %vm161, %v101, 0
  %165 = vmatpush.bf16.msra.mxu0 0
  %166 = vmatpush.bf16.msra.mxu0 0
  %167 = vmatpush.bf16.msra.mxu0 0
  %168 = vmatpush.bf16.msra.mxu0 0
  %169 = vmatpush.bf16.msra.mxu0 0
  %170 = vmatpush.bf16.msra.mxu0 0
  %171 = vmatpush.bf16.msra.mxu0 %v163
  %172 = vmatpush.bf16.msra.mxu0 %v100
  %173 = vmatmul.bf16.gmra.mxu0 %v105
  %v174 = vpop.f32.mrf.mxu0
  %v175 = vadd.f32 %v90, %v174
  %v176 = vpop.f32.mrf.mxu0
  %v177 = vadd.f32 %v90, %v176
  %178 = vmatmul.bf16.gmra.mxu0 %v108
  %v179 = vpop.f32.mrf.mxu0
  %v180 = vadd.f32 %v90, %v179
  %v181 = vpop.f32.mrf.mxu0
  %v182 = vadd.f32 %v90, %v181
  %183 = vmatmul.bf16.gmra.mxu0 %v111
  %v184 = vpop.f32.mrf.mxu0
  %v185 = vadd.f32 %v90, %v184
  %v186 = vpop.f32.mrf.mxu0
  %v187 = vadd.f32 %v90, %v186
  %188 = vmatmul.bf16.gmra.mxu0 %v114
  %v189 = vpop.f32.mrf.mxu0
  %v190 = vadd.f32 %v90, %v189
  %v191 = vpop.f32.mrf.mxu0
  %v192 = vadd.f32 %v90, %v191
  %193 = vmatmul.bf16.gmra.mxu0 %v117
  %v194 = vpop.f32.mrf.mxu0
  %v195 = vadd.f32 %v90, %v194
  %v196 = vpop.f32.mrf.mxu0
  %v197 = vadd.f32 %v90, %v196
  %198 = vmatmul.bf16.gmra.mxu0 %v120
  %v199 = vpop.f32.mrf.mxu0
  %v200 = vadd.f32 %v90, %v199
  %v201 = vpop.f32.mrf.mxu0
  %v202 = vadd.f32 %v90, %v201
  %203 = vmatmul.bf16.gmra.mxu0 %v123
  %v204 = vpop.f32.mrf.mxu0
  %v205 = vadd.f32 %v90, %v204
  %v206 = vpop.f32.mrf.mxu0
  %v207 = vadd.f32 %v90, %v206
  %208 = vmatmul.bf16.gmra.mxu0 %v126
  %v209 = vpop.f32.mrf.mxu0
  %v210 = vadd.f32 %v90, %v209
  %v211 = vpop.f32.mrf.mxu0
  %v212 = vadd.f32 %v90, %v211
  %213 = vmatmul.bf16.gmra.mxu0 %v129
  %v214 = vpop.f32.mrf.mxu0
  %v215 = vadd.f32 %v90, %v214
  %v216 = vpop.f32.mrf.mxu0
  %v217 = vadd.f32 %v90, %v216
  %218 = vmatmul.bf16.gmra.mxu0 %v132
  %v219 = vpop.f32.mrf.mxu0
  %v220 = vadd.f32 %v90, %v219
  %v221 = vpop.f32.mrf.mxu0
  %v222 = vadd.f32 %v90, %v221
  %223 = vmatmul.bf16.gmra.mxu0 %v135
  %v224 = vpop.f32.mrf.mxu0
  %v225 = vadd.f32 %v90, %v224
  %v226 = vpop.f32.mrf.mxu0
  %v227 = vadd.f32 %v90, %v226
  %228 = vmatmul.bf16.gmra.mxu0 %v138
  %v229 = vpop.f32.mrf.mxu0
  %v230 = vadd.f32 %v90, %v229
  %v231 = vpop.f32.mrf.mxu0
  %v232 = vadd.f32 %v90, %v231
  %233 = vmatmul.bf16.gmra.mxu0 %v141
  %v234 = vpop.f32.mrf.mxu0
  %v235 = vadd.f32 %v90, %v234
  %v236 = vpop.f32.mrf.mxu0
  %v237 = vadd.f32 %v90, %v236
  %238 = vmatmul.bf16.gmra.mxu0 %v144
  %v239 = vpop.f32.mrf.mxu0
  %v240 = vadd.f32 %v90, %v239
  %v241 = vpop.f32.mrf.mxu0
  %v242 = vadd.f32 %v90, %v241
  %243 = vmatmul.bf16.gmra.mxu0 %v147
  %v244 = vpop.f32.mrf.mxu0
  %v245 = vadd.f32 %v90, %v244
  %v246 = vpop.f32.mrf.mxu0
  %v247 = vadd.f32 %v90, %v246
  %248 = vmatmul.bf16.gmra.mxu0 %v150
  %v249 = vpop.f32.mrf.mxu0
  %v250 = vadd.f32 %v90, %v249
  %v251 = vpop.f32.mrf.mxu0
  %v252 = vadd.f32 %v90, %v251
  %253 = vmatmul.bf16.gmra.mxu0 %v153
  %v254 = vpop.f32.mrf.mxu0
  %v255 = vadd.f32 %v90, %v254
  %v256 = vpop.f32.mrf.mxu0
  %v257 = vadd.f32 %v90, %v256
  %258 = vmatmul.bf16.gmra.mxu0 %v156
  %v259 = vpop.f32.mrf.mxu0
  %v260 = vadd.f32 %v90, %v259
  %v261 = vpop.f32.mrf.mxu0
  %v262 = vadd.f32 %v90, %v261
  %263 = vmatmul.bf16.gmra.mxu0 %v159
  %v264 = vpop.f32.mrf.mxu0
  %v265 = vadd.f32 %v90, %v264
  %v266 = vpop.f32.mrf.mxu0
  %v267 = vadd.f32 %v90, %v266
  %268 = vdwg.mxu0
  %v269 = vmax.f32 %v175, 0.0
  %v270 = vmax.f32 %v177, 0.0
  %v271 = vmax.f32 %v180, 0.0
  %v272 = vmax.f32 %v182, 0.0
  %v273 = vmax.f32 %v185, 0.0
  %v274 = vmax.f32 %v187, 0.0
  %v275 = vmax.f32 %v190, 0.0
  %v276 = vmax.f32 %v192, 0.0
  %v277 = vmax.f32 %v195, 0.0
  %v278 = vmax.f32 %v197, 0.0
  %v279 = vmax.f32 %v200, 0.0
  %v280 = vmax.f32 %v202, 0.0
  %v281 = vmax.f32 %v205, 0.0
  %v282 = vmax.f32 %v207, 0.0
  %v283 = vmax.f32 %v210, 0.0
  %v284 = vmax.f32 %v212, 0.0
  %v285 = vmax.f32 %v215, 0.0
  %v286 = vmax.f32 %v217, 0.0
  %v287 = vmax.f32 %v220, 0.0
  %v288 = vmax.f32 %v222, 0.0
  %v289 = vmax.f32 %v225, 0.0
  %v290 = vmax.f32 %v227, 0.0
  %v291 = vmax.f32 %v230, 0.0
  %v292 = vmax.f32 %v232, 0.0
  %v293 = vmax.f32 %v235, 0.0
  %v294 = vmax.f32 %v237, 0.0
  %v295 = vmax.f32 %v240, 0.0
  %v296 = vmax.f32 %v242, 0.0
  %v297 = vmax.f32 %v245, 0.0
  %v298 = vmax.f32 %v247, 0.0
  %v299 = vmax.f32 %v250, 0.0
  %v300 = vmax.f32 %v252, 0.0
  %v301 = vmax.f32 %v255, 0.0
  %v302 = vmax.f32 %v257, 0.0
  %v303 = vmax.f32 %v260, 0.0
  %v304 = vmax.f32 %v262, 0.0
  %v305 = vmax.f32 %v265, 0.0
  %v306 = vmax.f32 %v267, 0.0
  %v307 = vpack.c.bf16 %v270, %v269
  %v308 = vpack.c.bf16 %v272, %v271
  %v309 = vpack.c.bf16 %v274, %v273
  %v310 = vpack.c.bf16 %v276, %v275
  %v311 = vpack.c.bf16 %v278, %v277
  %v312 = vpack.c.bf16 %v280, %v279
  %v313 = vpack.c.bf16 %v282, %v281
  %v314 = vpack.c.bf16 %v284, %v283
  %v315 = vpack.c.bf16 %v286, %v285
  %v316 = vpack.c.bf16 %v288, %v287
  %v317 = vpack.c.bf16 %v290, %v289
  %v318 = vpack.c.bf16 %v292, %v291
  %v319 = vpack.c.bf16 %v294, %v293
  %v320 = vpack.c.bf16 %v296, %v295
  %v321 = vpack.c.bf16 %v298, %v297
  %v322 = vpack.c.bf16 %v300, %v299
  %v323 = vpack.c.bf16 %v302, %v301
  %v324 = vpack.c.bf16 %v304, %v303
  %v325 = vpack.c.bf16 %v306, %v305
  %v326 = vld [vmem:[%s3] sm:$0xf]
  %v327 = vld [vmem:[%s3 + $0x4] sm:$0xf]
  %v328 = vld [vmem:[%s3 + $0x8] sm:$0xf]
  %v329 = vld [vmem:[%s3 + $0xc] sm:$0xf]
  %v330 = vld [vmem:[%s3 + $0x10] sm:$0xf]
  %v331 = vld [vmem:[%s3 + $0x14] sm:$0xf]
  %v332 = vld [vmem:[%s3 + $0x18] sm:$0xf]
  %v333 = vld [vmem:[%s3 + $0x1c] sm:$0xf]
  %v334 = vld [vmem:[%s3 + $0x20] sm:$0xf]
  %v335 = vld [vmem:[%s3 + $0x24] sm:$0xf]
  %v336 = vld [vmem:[%s3 + $0x28] sm:$0xf]
  %v337 = vld [vmem:[%s3 + $0x2c] sm:$0xf]
  %v338 = vld [vmem:[%s3 + $0x30] sm:$0xf]
  %v339 = vld [vmem:[%s3 + $0x34] sm:$0xf]
  %v340 = vld [vmem:[%s3 + $0x38] sm:$0xf]
  %v341 = vld [vmem:[%s3 + $0x3c] sm:$0xf]
  %v342 = vld [vmem:[%s4] sm:$0x1]
  %v344 = vperm.slane %v342, 0
  %v362 = vunpack.c.l.b16 %v326
  %v363 = vunpack.c.l.b16 %v327
  %v364 = vunpack.c.l.b16 %v328
  %v365 = vunpack.c.l.b16 %v329
  %v366 = vunpack.c.l.b16 %v330
  %v367 = vunpack.c.l.b16 %v331
  %v368 = vunpack.c.l.b16 %v332
  %v369 = vunpack.c.l.b16 %v333
  %v370 = vunpack.c.l.b16 %v334
  %v371 = vunpack.c.l.b16 %v335
  %v372 = vunpack.c.l.b16 %v336
  %v373 = vunpack.c.l.b16 %v337
  %v374 = vunpack.c.l.b16 %v338
  %v375 = vunpack.c.l.b16 %v339
  %v376 = vunpack.c.l.b16 %v340
  %v377 = vunpack.c.l.b16 %v341
  %v378 = vpack.c.b16 %v363, %v362
  %v379 = vpack.c.b16 %v365, %v364
  %v380 = vpack.c.b16 %v367, %v366
  %v381 = vpack.c.b16 %v369, %v368
  %v382 = vpack.c.b16 %v371, %v370
  %v383 = vpack.c.b16 %v373, %v372
  %v384 = vpack.c.b16 %v375, %v374
  %v385 = vpack.c.b16 %v377, %v376
  %394 = vmatpush.bf16.msra.mxu0 %v385
  %395 = vmatpush.bf16.msra.mxu0 %v384
  %396 = vmatpush.bf16.msra.mxu0 %v383
  %397 = vmatpush.bf16.msra.mxu0 %v382
  %398 = vmatpush.bf16.msra.mxu0 %v381
  %399 = vmatpush.bf16.msra.mxu0 %v380
  %400 = vmatpush.bf16.msra.mxu0 %v379
  %401 = vmatpush.bf16.msra.mxu0 %v378
  %402 = vmatmul.bf16.gmra.mxu0 %v307
  %v403 = vpop.f32.mrf.mxu0
  %v404 = vadd.f32 %v344, %v403
  %v405 = vpop.f32.mrf.mxu0
  %v406 = vadd.f32 %v344, %v405
  %407 = vmatmul.bf16.gmra.mxu0 %v308
  %v408 = vpop.f32.mrf.mxu0
  %v409 = vadd.f32 %v344, %v408
  %v410 = vpop.f32.mrf.mxu0
  %v411 = vadd.f32 %v344, %v410
  %412 = vmatmul.bf16.gmra.mxu0 %v309
  %v413 = vpop.f32.mrf.mxu0
  %v414 = vadd.f32 %v344, %v413
  %v415 = vpop.f32.mrf.mxu0
  %v416 = vadd.f32 %v344, %v415
  %417 = vmatmul.bf16.gmra.mxu0 %v310
  %v418 = vpop.f32.mrf.mxu0
  %v419 = vadd.f32 %v344, %v418
  %v420 = vpop.f32.mrf.mxu0
  %v421 = vadd.f32 %v344, %v420
  %422 = vmatmul.bf16.gmra.mxu0 %v311
  %v423 = vpop.f32.mrf.mxu0
  %v424 = vadd.f32 %v344, %v423
  %v425 = vpop.f32.mrf.mxu0
  %v426 = vadd.f32 %v344, %v425
  %427 = vmatmul.bf16.gmra.mxu0 %v312
  %v428 = vpop.f32.mrf.mxu0
  %v429 = vadd.f32 %v344, %v428
  %v430 = vpop.f32.mrf.mxu0
  %v431 = vadd.f32 %v344, %v430
  %432 = vmatmul.bf16.gmra.mxu0 %v313
  %v433 = vpop.f32.mrf.mxu0
  %v434 = vadd.f32 %v344, %v433
  %v435 = vpop.f32.mrf.mxu0
  %v436 = vadd.f32 %v344, %v435
  %437 = vmatmul.bf16.gmra.mxu0 %v314
  %v438 = vpop.f32.mrf.mxu0
  %v439 = vadd.f32 %v344, %v438
  %v440 = vpop.f32.mrf.mxu0
  %v441 = vadd.f32 %v344, %v440
  %442 = vmatmul.bf16.gmra.mxu0 %v315
  %v443 = vpop.f32.mrf.mxu0
  %v444 = vadd.f32 %v344, %v443
  %v445 = vpop.f32.mrf.mxu0
  %v446 = vadd.f32 %v344, %v445
  %447 = vmatmul.bf16.gmra.mxu0 %v316
  %v448 = vpop.f32.mrf.mxu0
  %v449 = vadd.f32 %v344, %v448
  %v450 = vpop.f32.mrf.mxu0
  %v451 = vadd.f32 %v344, %v450
  %452 = vmatmul.bf16.gmra.mxu0 %v317
  %v453 = vpop.f32.mrf.mxu0
  %v454 = vadd.f32 %v344, %v453
  %v455 = vpop.f32.mrf.mxu0
  %v456 = vadd.f32 %v344, %v455
  %457 = vmatmul.bf16.gmra.mxu0 %v318
  %v458 = vpop.f32.mrf.mxu0
  %v459 = vadd.f32 %v344, %v458
  %v460 = vpop.f32.mrf.mxu0
  %v461 = vadd.f32 %v344, %v460
  %462 = vmatmul.bf16.gmra.mxu0 %v319
  %v463 = vpop.f32.mrf.mxu0
  %v464 = vadd.f32 %v344, %v463
  %v465 = vpop.f32.mrf.mxu0
  %v466 = vadd.f32 %v344, %v465
  %467 = vmatmul.bf16.gmra.mxu0 %v320
  %v468 = vpop.f32.mrf.mxu0
  %v469 = vadd.f32 %v344, %v468
  %v470 = vpop.f32.mrf.mxu0
  %v471 = vadd.f32 %v344, %v470
  %472 = vmatmul.bf16.gmra.mxu0 %v321
  %v473 = vpop.f32.mrf.mxu0
  %v474 = vadd.f32 %v344, %v473
  %v475 = vpop.f32.mrf.mxu0
  %v476 = vadd.f32 %v344, %v475
  %477 = vmatmul.bf16.gmra.mxu0 %v322
  %v478 = vpop.f32.mrf.mxu0
  %v479 = vadd.f32 %v344, %v478
  %v480 = vpop.f32.mrf.mxu0
  %v481 = vadd.f32 %v344, %v480
  %482 = vmatmul.bf16.gmra.mxu0 %v323
  %v483 = vpop.f32.mrf.mxu0
  %v484 = vadd.f32 %v344, %v483
  %v485 = vpop.f32.mrf.mxu0
  %v486 = vadd.f32 %v344, %v485
  %487 = vmatmul.bf16.gmra.mxu0 %v324
  %v488 = vpop.f32.mrf.mxu0
  %v489 = vadd.f32 %v344, %v488
  %v490 = vpop.f32.mrf.mxu0
  %v491 = vadd.f32 %v344, %v490
  %492 = vmatmul.bf16.gmra.mxu0 %v325
  %v493 = vpop.f32.mrf.mxu0
  %v494 = vadd.f32 %v344, %v493
  %v495 = vpop.f32.mrf.mxu0
  %v496 = vadd.f32 %v344, %v495
  %497 = vdwg.mxu0
  %v498 = vmax.f32 %v404, 0.0
  %v499 = vmax.f32 %v406, 0.0
  %v500 = vmax.f32 %v409, 0.0
  %v501 = vmax.f32 %v411, 0.0
  %v502 = vmax.f32 %v414, 0.0
  %v503 = vmax.f32 %v416, 0.0
  %v504 = vmax.f32 %v419, 0.0
  %v505 = vmax.f32 %v421, 0.0
  %v506 = vmax.f32 %v424, 0.0
  %v507 = vmax.f32 %v426, 0.0
  %v508 = vmax.f32 %v429, 0.0
  %v509 = vmax.f32 %v431, 0.0
  %v510 = vmax.f32 %v434, 0.0
  %v511 = vmax.f32 %v436, 0.0
  %v512 = vmax.f32 %v439, 0.0
  %v513 = vmax.f32 %v441, 0.0
  %v514 = vmax.f32 %v444, 0.0
  %v515 = vmax.f32 %v446, 0.0
  %v516 = vmax.f32 %v449, 0.0
  %v517 = vmax.f32 %v451, 0.0
  %v518 = vmax.f32 %v454, 0.0
  %v519 = vmax.f32 %v456, 0.0
  %v520 = vmax.f32 %v459, 0.0
  %v521 = vmax.f32 %v461, 0.0
  %v522 = vmax.f32 %v464, 0.0
  %v523 = vmax.f32 %v466, 0.0
  %v524 = vmax.f32 %v469, 0.0
  %v525 = vmax.f32 %v471, 0.0
  %v526 = vmax.f32 %v474, 0.0
  %v527 = vmax.f32 %v476, 0.0
  %v528 = vmax.f32 %v479, 0.0
  %v529 = vmax.f32 %v481, 0.0
  %v530 = vmax.f32 %v484, 0.0
  %v531 = vmax.f32 %v486, 0.0
  %v532 = vmax.f32 %v489, 0.0
  %v533 = vmax.f32 %v491, 0.0
  %v534 = vmax.f32 %v494, 0.0
  %v535 = vmax.f32 %v496, 0.0
  %v536 = vpack.c.bf16 %v499, %v498
  %v537 = vpack.c.bf16 %v501, %v500
  %v538 = vpack.c.bf16 %v503, %v502
  %v539 = vpack.c.bf16 %v505, %v504
  %v540 = vpack.c.bf16 %v507, %v506
  %v541 = vpack.c.bf16 %v509, %v508
  %v542 = vpack.c.bf16 %v511, %v510
  %v543 = vpack.c.bf16 %v513, %v512
  %v544 = vpack.c.bf16 %v515, %v514
  %v545 = vpack.c.bf16 %v517, %v516
  %v546 = vpack.c.bf16 %v519, %v518
  %v547 = vpack.c.bf16 %v521, %v520
  %v548 = vpack.c.bf16 %v523, %v522
  %v549 = vpack.c.bf16 %v525, %v524
  %v550 = vpack.c.bf16 %v527, %v526
  %v551 = vpack.c.bf16 %v529, %v528
  %v552 = vpack.c.bf16 %v531, %v530
  %v553 = vpack.c.bf16 %v533, %v532
  %v554 = vpack.c.bf16 %v535, %v534
  %v555 = vld [vmem:[%s5] sm:$0xf]
  %v556 = vld [vmem:[%s5 + $0x4] sm:$0xf]
  %v557 = vld [vmem:[%s5 + $0x8] sm:$0xf]
  %v558 = vld [vmem:[%s5 + $0xc] sm:$0xf]
  %v559 = vld [vmem:[%s5 + $0x10] sm:$0xf]
  %v560 = vld [vmem:[%s5 + $0x14] sm:$0xf]
  %v561 = vld [vmem:[%s5 + $0x18] sm:$0xf]
  %v562 = vld [vmem:[%s5 + $0x1c] sm:$0xf]
  %v563 = vld [vmem:[%s5 + $0x20] sm:$0xf]
  %v564 = vld [vmem:[%s5 + $0x24] sm:$0xf]
  %v565 = vld [vmem:[%s5 + $0x28] sm:$0xf]
  %v566 = vld [vmem:[%s5 + $0x2c] sm:$0xf]
  %v567 = vld [vmem:[%s5 + $0x30] sm:$0xf]
  %v568 = vld [vmem:[%s5 + $0x34] sm:$0xf]
  %v569 = vld [vmem:[%s5 + $0x38] sm:$0xf]
  %v570 = vld [vmem:[%s5 + $0x3c] sm:$0xf]
  %v571 = vld [vmem:[%s6] sm:$0x1]
  %v573 = vperm.slane %v571, 0
  %v591 = vunpack.c.l.b16 %v555
  %v592 = vunpack.c.l.b16 %v556
  %v593 = vunpack.c.l.b16 %v557
  %v594 = vunpack.c.l.b16 %v558
  %v595 = vunpack.c.l.b16 %v559
  %v596 = vunpack.c.l.b16 %v560
  %v597 = vunpack.c.l.b16 %v561
  %v598 = vunpack.c.l.b16 %v562
  %v599 = vunpack.c.l.b16 %v563
  %v600 = vunpack.c.l.b16 %v564
  %v601 = vunpack.c.l.b16 %v565
  %v602 = vunpack.c.l.b16 %v566
  %v603 = vunpack.c.l.b16 %v567
  %v604 = vunpack.c.l.b16 %v568
  %v605 = vunpack.c.l.b16 %v569
  %v606 = vunpack.c.l.b16 %v570
  %v607 = vpack.c.b16 %v592, %v591
  %v608 = vpack.c.b16 %v594, %v593
  %v609 = vpack.c.b16 %v596, %v595
  %v610 = vpack.c.b16 %v598, %v597
  %v611 = vpack.c.b16 %v600, %v599
  %v612 = vpack.c.b16 %v602, %v601
  %v613 = vpack.c.b16 %v604, %v603
  %v614 = vpack.c.b16 %v606, %v605
  %623 = vmatpush.bf16.msra.mxu0 %v614
  %624 = vmatpush.bf16.msra.mxu0 %v613
  %625 = vmatpush.bf16.msra.mxu0 %v612
  %626 = vmatpush.bf16.msra.mxu0 %v611
  %627 = vmatpush.bf16.msra.mxu0 %v610
  %628 = vmatpush.bf16.msra.mxu0 %v609
  %629 = vmatpush.bf16.msra.mxu0 %v608
  %630 = vmatpush.bf16.msra.mxu0 %v607
  %631 = vmatmul.bf16.gmra.mxu0 %v536
  %v632 = vpop.f32.mrf.mxu0
  %v633 = vadd.f32 %v573, %v632
  %v634 = vpop.f32.mrf.mxu0
  %v635 = vadd.f32 %v573, %v634
  %636 = vmatmul.bf16.gmra.mxu0 %v537
  %v637 = vpop.f32.mrf.mxu0
  %v638 = vadd.f32 %v573, %v637
  %v639 = vpop.f32.mrf.mxu0
  %v640 = vadd.f32 %v573, %v639
  %641 = vmatmul.bf16.gmra.mxu0 %v538
  %v642 = vpop.f32.mrf.mxu0
  %v643 = vadd.f32 %v573, %v642
  %v644 = vpop.f32.mrf.mxu0
  %v645 = vadd.f32 %v573, %v644
  %646 = vmatmul.bf16.gmra.mxu0 %v539
  %v647 = vpop.f32.mrf.mxu0
  %v648 = vadd.f32 %v573, %v647
  %v649 = vpop.f32.mrf.mxu0
  %v650 = vadd.f32 %v573, %v649
  %651 = vmatmul.bf16.gmra.mxu0 %v540
  %v652 = vpop.f32.mrf.mxu0
  %v653 = vadd.f32 %v573, %v652
  %v654 = vpop.f32.mrf.mxu0
  %v655 = vadd.f32 %v573, %v654
  %656 = vmatmul.bf16.gmra.mxu0 %v541
  %v657 = vpop.f32.mrf.mxu0
  %v658 = vadd.f32 %v573, %v657
  %v659 = vpop.f32.mrf.mxu0
  %v660 = vadd.f32 %v573, %v659
  %661 = vmatmul.bf16.gmra.mxu0 %v542
  %v662 = vpop.f32.mrf.mxu0
  %v663 = vadd.f32 %v573, %v662
  %v664 = vpop.f32.mrf.mxu0
  %v665 = vadd.f32 %v573, %v664
  %666 = vmatmul.bf16.gmra.mxu0 %v543
  %v667 = vpop.f32.mrf.mxu0
  %v668 = vadd.f32 %v573, %v667
  %v669 = vpop.f32.mrf.mxu0
  %v670 = vadd.f32 %v573, %v669
  %671 = vmatmul.bf16.gmra.mxu0 %v544
  %v672 = vpop.f32.mrf.mxu0
  %v673 = vadd.f32 %v573, %v672
  %v674 = vpop.f32.mrf.mxu0
  %v675 = vadd.f32 %v573, %v674
  %676 = vmatmul.bf16.gmra.mxu0 %v545
  %v677 = vpop.f32.mrf.mxu0
  %v678 = vadd.f32 %v573, %v677
  %v679 = vpop.f32.mrf.mxu0
  %v680 = vadd.f32 %v573, %v679
  %681 = vmatmul.bf16.gmra.mxu0 %v546
  %v682 = vpop.f32.mrf.mxu0
  %v683 = vadd.f32 %v573, %v682
  %v684 = vpop.f32.mrf.mxu0
  %v685 = vadd.f32 %v573, %v684
  %686 = vmatmul.bf16.gmra.mxu0 %v547
  %v687 = vpop.f32.mrf.mxu0
  %v688 = vadd.f32 %v573, %v687
  %v689 = vpop.f32.mrf.mxu0
  %v690 = vadd.f32 %v573, %v689
  %691 = vmatmul.bf16.gmra.mxu0 %v548
  %v692 = vpop.f32.mrf.mxu0
  %v693 = vadd.f32 %v573, %v692
  %v694 = vpop.f32.mrf.mxu0
  %v695 = vadd.f32 %v573, %v694
  %696 = vmatmul.bf16.gmra.mxu0 %v549
  %v697 = vpop.f32.mrf.mxu0
  %v698 = vadd.f32 %v573, %v697
  %v699 = vpop.f32.mrf.mxu0
  %v700 = vadd.f32 %v573, %v699
  %701 = vmatmul.bf16.gmra.mxu0 %v550
  %v702 = vpop.f32.mrf.mxu0
  %v703 = vadd.f32 %v573, %v702
  %v704 = vpop.f32.mrf.mxu0
  %v705 = vadd.f32 %v573, %v704
  %706 = vmatmul.bf16.gmra.mxu0 %v551
  %v707 = vpop.f32.mrf.mxu0
  %v708 = vadd.f32 %v573, %v707
  %v709 = vpop.f32.mrf.mxu0
  %v710 = vadd.f32 %v573, %v709
  %711 = vmatmul.bf16.gmra.mxu0 %v552
  %v712 = vpop.f32.mrf.mxu0
  %v713 = vadd.f32 %v573, %v712
  %v714 = vpop.f32.mrf.mxu0
  %v715 = vadd.f32 %v573, %v714
  %716 = vmatmul.bf16.gmra.mxu0 %v553
  %v717 = vpop.f32.mrf.mxu0
  %v718 = vadd.f32 %v573, %v717
  %v719 = vpop.f32.mrf.mxu0
  %v720 = vadd.f32 %v573, %v719
  %721 = vmatmul.bf16.gmra.mxu0 %v554
  %v722 = vpop.f32.mrf.mxu0
  %v723 = vadd.f32 %v573, %v722
  %v724 = vpop.f32.mrf.mxu0
  %v725 = vadd.f32 %v573, %v724
  %726 = vdwg.mxu0
  %v727 = vxor.u32 %v633, 2147483648
  %v728 = vxor.u32 %v635, 2147483648
  %v729 = vxor.u32 %v638, 2147483648
  %v730 = vxor.u32 %v640, 2147483648
  %v731 = vxor.u32 %v643, 2147483648
  %v732 = vxor.u32 %v645, 2147483648
  %v733 = vxor.u32 %v648, 2147483648
  %v734 = vxor.u32 %v650, 2147483648
  %v735 = vxor.u32 %v653, 2147483648
  %v736 = vxor.u32 %v655, 2147483648
  %v737 = vxor.u32 %v658, 2147483648
  %v738 = vxor.u32 %v660, 2147483648
  %v739 = vxor.u32 %v663, 2147483648
  %v740 = vxor.u32 %v665, 2147483648
  %v741 = vxor.u32 %v668, 2147483648
  %v742 = vxor.u32 %v670, 2147483648
  %v743 = vxor.u32 %v673, 2147483648
  %v744 = vxor.u32 %v675, 2147483648
  %v745 = vxor.u32 %v678, 2147483648
  %v746 = vxor.u32 %v680, 2147483648
  %v747 = vxor.u32 %v683, 2147483648
  %v748 = vxor.u32 %v685, 2147483648
  %v749 = vxor.u32 %v688, 2147483648
  %v750 = vxor.u32 %v690, 2147483648
  %v751 = vxor.u32 %v693, 2147483648
  %v752 = vxor.u32 %v695, 2147483648
  %v753 = vxor.u32 %v698, 2147483648
  %v754 = vxor.u32 %v700, 2147483648
  %v755 = vxor.u32 %v703, 2147483648
  %v756 = vxor.u32 %v705, 2147483648
  %v757 = vxor.u32 %v708, 2147483648
  %v758 = vxor.u32 %v710, 2147483648
  %v759 = vxor.u32 %v713, 2147483648
  %v760 = vxor.u32 %v715, 2147483648
  %v761 = vxor.u32 %v718, 2147483648
  %v762 = vxor.u32 %v720, 2147483648
  %v763 = vxor.u32 %v723, 2147483648
  %v764 = vxor.u32 %v725, 2147483648
  %v765 = vmul.f32 %v727, 1.442695
  %v766 = vpow.pop %v765
  %v767 = vmul.f32 %v728, 1.442695
  %v768 = vpow.pop %v767
  %v769 = vmul.f32 %v729, 1.442695
  %v770 = vpow.pop %v769
  %v771 = vmul.f32 %v730, 1.442695
  %v772 = vpow.pop %v771
  %v773 = vmul.f32 %v731, 1.442695
  %v774 = vpow.pop %v773
  %v775 = vmul.f32 %v732, 1.442695
  %v776 = vpow.pop %v775
  %v777 = vmul.f32 %v733, 1.442695
  %v778 = vpow.pop %v777
  %v779 = vmul.f32 %v734, 1.442695
  %v780 = vpow.pop %v779
  %v781 = vmul.f32 %v735, 1.442695
  %v782 = vpow.pop %v781
  %v783 = vmul.f32 %v736, 1.442695
  %v784 = vpow.pop %v783
  %v785 = vmul.f32 %v737, 1.442695
  %v786 = vpow.pop %v785
  %v787 = vmul.f32 %v738, 1.442695
  %v788 = vpow.pop %v787
  %v789 = vmul.f32 %v739, 1.442695
  %v790 = vpow.pop %v789
  %v791 = vmul.f32 %v740, 1.442695
  %v792 = vpow.pop %v791
  %v793 = vmul.f32 %v741, 1.442695
  %v794 = vpow.pop %v793
  %v795 = vmul.f32 %v742, 1.442695
  %v796 = vpow.pop %v795
  %v797 = vmul.f32 %v743, 1.442695
  %v798 = vpow.pop %v797
  %v799 = vmul.f32 %v744, 1.442695
  %v800 = vpow.pop %v799
  %v801 = vmul.f32 %v745, 1.442695
  %v802 = vpow.pop %v801
  %v803 = vmul.f32 %v746, 1.442695
  %v804 = vpow.pop %v803
  %v805 = vmul.f32 %v747, 1.442695
  %v806 = vpow.pop %v805
  %v807 = vmul.f32 %v748, 1.442695
  %v808 = vpow.pop %v807
  %v809 = vmul.f32 %v749, 1.442695
  %v810 = vpow.pop %v809
  %v811 = vmul.f32 %v750, 1.442695
  %v812 = vpow.pop %v811
  %v813 = vmul.f32 %v751, 1.442695
  %v814 = vpow.pop %v813
  %v815 = vmul.f32 %v752, 1.442695
  %v816 = vpow.pop %v815
  %v817 = vmul.f32 %v753, 1.442695
  %v818 = vpow.pop %v817
  %v819 = vmul.f32 %v754, 1.442695
  %v820 = vpow.pop %v819
  %v821 = vmul.f32 %v755, 1.442695
  %v822 = vpow.pop %v821
  %v823 = vmul.f32 %v756, 1.442695
  %v824 = vpow.pop %v823
  %v825 = vmul.f32 %v757, 1.442695
  %v826 = vpow.pop %v825
  %v827 = vmul.f32 %v758, 1.442695
  %v828 = vpow.pop %v827
  %v829 = vmul.f32 %v759, 1.442695
  %v830 = vpow.pop %v829
  %v831 = vmul.f32 %v760, 1.442695
  %v832 = vpow.pop %v831
  %v833 = vmul.f32 %v761, 1.442695
  %v834 = vpow.pop %v833
  %v835 = vmul.f32 %v762, 1.442695
  %v836 = vpow.pop %v835
  %v837 = vmul.f32 %v763, 1.442695
  %v838 = vpow.pop %v837
  %v839 = vmul.f32 %v764, 1.442695
  %v840 = vpow.pop %v839
  %v841 = vadd.f32 %v766, 1.0
  %v842 = vadd.f32 %v768, 1.0
  %v843 = vadd.f32 %v770, 1.0
  %v844 = vadd.f32 %v772, 1.0
  %v845 = vadd.f32 %v774, 1.0
  %v846 = vadd.f32 %v776, 1.0
  %v847 = vadd.f32 %v778, 1.0
  %v848 = vadd.f32 %v780, 1.0
  %v849 = vadd.f32 %v782, 1.0
  %v850 = vadd.f32 %v784, 1.0
  %v851 = vadd.f32 %v786, 1.0
  %v852 = vadd.f32 %v788, 1.0
  %v853 = vadd.f32 %v790, 1.0
  %v854 = vadd.f32 %v792, 1.0
  %v855 = vadd.f32 %v794, 1.0
  %v856 = vadd.f32 %v796, 1.0
  %v857 = vadd.f32 %v798, 1.0
  %v858 = vadd.f32 %v800, 1.0
  %v859 = vadd.f32 %v802, 1.0
  %v860 = vadd.f32 %v804, 1.0
  %v861 = vadd.f32 %v806, 1.0
  %v862 = vadd.f32 %v808, 1.0
  %v863 = vadd.f32 %v810, 1.0
  %v864 = vadd.f32 %v812, 1.0
  %v865 = vadd.f32 %v814, 1.0
  %v866 = vadd.f32 %v816, 1.0
  %v867 = vadd.f32 %v818, 1.0
  %v868 = vadd.f32 %v820, 1.0
  %v869 = vadd.f32 %v822, 1.0
  %v870 = vadd.f32 %v824, 1.0
  %v871 = vadd.f32 %v826, 1.0
  %v872 = vadd.f32 %v828, 1.0
  %v873 = vadd.f32 %v830, 1.0
  %v874 = vadd.f32 %v832, 1.0
  %v875 = vadd.f32 %v834, 1.0
  %v876 = vadd.f32 %v836, 1.0
  %v877 = vadd.f32 %v838, 1.0
  %v878 = vadd.f32 %v840, 1.0
  %v879 = vrcp.pop %v841
  %v880 = vmul.f32 %v841, %v879
  %v881 = vsub.f32 1.0, %v880
  %v882 = vmul.f32 %v879, %v881
  %v883 = vadd.f32 %v879, %v882
  %vm884 = vweird.f32 %v841
  %vm885 = vweird.f32 %v879
  %vm886 = vmor %vm884, %vm885
  %v887 = vsel %vm886, %v879, %v883
  %v888 = vand.u32 2147483647, %v841
  %vm889 = vcmp.eq.f32.partialorder %v888, 8.507059e+37
  %v890 = vand.u32 %v841, 2147483648
  %v891 = vor.u32 1.1754944e-38, %v890
  %v892 = vsel %vm889, %v891, %v887
  %v893 = vmul.f32 1.0, %v892
  %v894 = vrcp.pop %v842
  %v895 = vmul.f32 %v842, %v894
  %v896 = vsub.f32 1.0, %v895
  %v897 = vmul.f32 %v894, %v896
  %v898 = vadd.f32 %v894, %v897
  %vm899 = vweird.f32 %v842
  %vm900 = vweird.f32 %v894
  %vm901 = vmor %vm899, %vm900
  %v902 = vsel %vm901, %v894, %v898
  %v903 = vand.u32 2147483647, %v842
  %vm904 = vcmp.eq.f32.partialorder %v903, 8.507059e+37
  %v905 = vand.u32 %v842, 2147483648
  %v906 = vor.u32 1.1754944e-38, %v905
  %v907 = vsel %vm904, %v906, %v902
  %v908 = vmul.f32 1.0, %v907
  %v909 = vrcp.pop %v843
  %v910 = vmul.f32 %v843, %v909
  %v911 = vsub.f32 1.0, %v910
  %v912 = vmul.f32 %v909, %v911
  %v913 = vadd.f32 %v909, %v912
  %vm914 = vweird.f32 %v843
  %vm915 = vweird.f32 %v909
  %vm916 = vmor %vm914, %vm915
  %v917 = vsel %vm916, %v909, %v913
  %v918 = vand.u32 2147483647, %v843
  %vm919 = vcmp.eq.f32.partialorder %v918, 8.507059e+37
  %v920 = vand.u32 %v843, 2147483648
  %v921 = vor.u32 1.1754944e-38, %v920
  %v922 = vsel %vm919, %v921, %v917
  %v923 = vmul.f32 1.0, %v922
  %v924 = vrcp.pop %v844
  %v925 = vmul.f32 %v844, %v924
  %v926 = vsub.f32 1.0, %v925
  %v927 = vmul.f32 %v924, %v926
  %v928 = vadd.f32 %v924, %v927
  %vm929 = vweird.f32 %v844
  %vm930 = vweird.f32 %v924
  %vm931 = vmor %vm929, %vm930
  %v932 = vsel %vm931, %v924, %v928
  %v933 = vand.u32 2147483647, %v844
  %vm934 = vcmp.eq.f32.partialorder %v933, 8.507059e+37
  %v935 = vand.u32 %v844, 2147483648
  %v936 = vor.u32 1.1754944e-38, %v935
  %v937 = vsel %vm934, %v936, %v932
  %v938 = vmul.f32 1.0, %v937
  %v939 = vrcp.pop %v845
  %v940 = vmul.f32 %v845, %v939
  %v941 = vsub.f32 1.0, %v940
  %v942 = vmul.f32 %v939, %v941
  %v943 = vadd.f32 %v939, %v942
  %vm944 = vweird.f32 %v845
  %vm945 = vweird.f32 %v939
  %vm946 = vmor %vm944, %vm945
  %v947 = vsel %vm946, %v939, %v943
  %v948 = vand.u32 2147483647, %v845
  %vm949 = vcmp.eq.f32.partialorder %v948, 8.507059e+37
  %v950 = vand.u32 %v845, 2147483648
  %v951 = vor.u32 1.1754944e-38, %v950
  %v952 = vsel %vm949, %v951, %v947
  %v953 = vmul.f32 1.0, %v952
  %v954 = vrcp.pop %v846
  %v955 = vmul.f32 %v846, %v954
  %v956 = vsub.f32 1.0, %v955
  %v957 = vmul.f32 %v954, %v956
  %v958 = vadd.f32 %v954, %v957
  %vm959 = vweird.f32 %v846
  %vm960 = vweird.f32 %v954
  %vm961 = vmor %vm959, %vm960
  %v962 = vsel %vm961, %v954, %v958
  %v963 = vand.u32 2147483647, %v846
  %vm964 = vcmp.eq.f32.partialorder %v963, 8.507059e+37
  %v965 = vand.u32 %v846, 2147483648
  %v966 = vor.u32 1.1754944e-38, %v965
  %v967 = vsel %vm964, %v966, %v962
  %v968 = vmul.f32 1.0, %v967
  %v969 = vrcp.pop %v847
  %v970 = vmul.f32 %v847, %v969
  %v971 = vsub.f32 1.0, %v970
  %v972 = vmul.f32 %v969, %v971
  %v973 = vadd.f32 %v969, %v972
  %vm974 = vweird.f32 %v847
  %vm975 = vweird.f32 %v969
  %vm976 = vmor %vm974, %vm975
  %v977 = vsel %vm976, %v969, %v973
  %v978 = vand.u32 2147483647, %v847
  %vm979 = vcmp.eq.f32.partialorder %v978, 8.507059e+37
  %v980 = vand.u32 %v847, 2147483648
  %v981 = vor.u32 1.1754944e-38, %v980
  %v982 = vsel %vm979, %v981, %v977
  %v983 = vmul.f32 1.0, %v982
  %v984 = vrcp.pop %v848
  %v985 = vmul.f32 %v848, %v984
  %v986 = vsub.f32 1.0, %v985
  %v987 = vmul.f32 %v984, %v986
  %v988 = vadd.f32 %v984, %v987
  %vm989 = vweird.f32 %v848
  %vm990 = vweird.f32 %v984
  %vm991 = vmor %vm989, %vm990
  %v992 = vsel %vm991, %v984, %v988
  %v993 = vand.u32 2147483647, %v848
  %vm994 = vcmp.eq.f32.partialorder %v993, 8.507059e+37
  %v995 = vand.u32 %v848, 2147483648
  %v996 = vor.u32 1.1754944e-38, %v995
  %v997 = vsel %vm994, %v996, %v992
  %v998 = vmul.f32 1.0, %v997
  %v999 = vrcp.pop %v849
  %v1000 = vmul.f32 %v849, %v999
  %v1001 = vsub.f32 1.0, %v1000
  %v1002 = vmul.f32 %v999, %v1001
  %v1003 = vadd.f32 %v999, %v1002
  %vm1004 = vweird.f32 %v849
  %vm1005 = vweird.f32 %v999
  %vm1006 = vmor %vm1004, %vm1005
  %v1007 = vsel %vm1006, %v999, %v1003
  %v1008 = vand.u32 2147483647, %v849
  %vm1009 = vcmp.eq.f32.partialorder %v1008, 8.507059e+37
  %v1010 = vand.u32 %v849, 2147483648
  %v1011 = vor.u32 1.1754944e-38, %v1010
  %v1012 = vsel %vm1009, %v1011, %v1007
  %v1013 = vmul.f32 1.0, %v1012
  %v1014 = vrcp.pop %v850
  %v1015 = vmul.f32 %v850, %v1014
  %v1016 = vsub.f32 1.0, %v1015
  %v1017 = vmul.f32 %v1014, %v1016
  %v1018 = vadd.f32 %v1014, %v1017
  %vm1019 = vweird.f32 %v850
  %vm1020 = vweird.f32 %v1014
  %vm1021 = vmor %vm1019, %vm1020
  %v1022 = vsel %vm1021, %v1014, %v1018
  %v1023 = vand.u32 2147483647, %v850
  %vm1024 = vcmp.eq.f32.partialorder %v1023, 8.507059e+37
  %v1025 = vand.u32 %v850, 2147483648
  %v1026 = vor.u32 1.1754944e-38, %v1025
  %v1027 = vsel %vm1024, %v1026, %v1022
  %v1028 = vmul.f32 1.0, %v1027
  %v1029 = vrcp.pop %v851
  %v1030 = vmul.f32 %v851, %v1029
  %v1031 = vsub.f32 1.0, %v1030
  %v1032 = vmul.f32 %v1029, %v1031
  %v1033 = vadd.f32 %v1029, %v1032
  %vm1034 = vweird.f32 %v851
  %vm1035 = vweird.f32 %v1029
  %vm1036 = vmor %vm1034, %vm1035
  %v1037 = vsel %vm1036, %v1029, %v1033
  %v1038 = vand.u32 2147483647, %v851
  %vm1039 = vcmp.eq.f32.partialorder %v1038, 8.507059e+37
  %v1040 = vand.u32 %v851, 2147483648
  %v1041 = vor.u32 1.1754944e-38, %v1040
  %v1042 = vsel %vm1039, %v1041, %v1037
  %v1043 = vmul.f32 1.0, %v1042
  %v1044 = vrcp.pop %v852
  %v1045 = vmul.f32 %v852, %v1044
  %v1046 = vsub.f32 1.0, %v1045
  %v1047 = vmul.f32 %v1044, %v1046
  %v1048 = vadd.f32 %v1044, %v1047
  %vm1049 = vweird.f32 %v852
  %vm1050 = vweird.f32 %v1044
  %vm1051 = vmor %vm1049, %vm1050
  %v1052 = vsel %vm1051, %v1044, %v1048
  %v1053 = vand.u32 2147483647, %v852
  %vm1054 = vcmp.eq.f32.partialorder %v1053, 8.507059e+37
  %v1055 = vand.u32 %v852, 2147483648
  %v1056 = vor.u32 1.1754944e-38, %v1055
  %v1057 = vsel %vm1054, %v1056, %v1052
  %v1058 = vmul.f32 1.0, %v1057
  %v1059 = vrcp.pop %v853
  %v1060 = vmul.f32 %v853, %v1059
  %v1061 = vsub.f32 1.0, %v1060
  %v1062 = vmul.f32 %v1059, %v1061
  %v1063 = vadd.f32 %v1059, %v1062
  %vm1064 = vweird.f32 %v853
  %vm1065 = vweird.f32 %v1059
  %vm1066 = vmor %vm1064, %vm1065
  %v1067 = vsel %vm1066, %v1059, %v1063
  %v1068 = vand.u32 2147483647, %v853
  %vm1069 = vcmp.eq.f32.partialorder %v1068, 8.507059e+37
  %v1070 = vand.u32 %v853, 2147483648
  %v1071 = vor.u32 1.1754944e-38, %v1070
  %v1072 = vsel %vm1069, %v1071, %v1067
  %v1073 = vmul.f32 1.0, %v1072
  %v1074 = vrcp.pop %v854
  %v1075 = vmul.f32 %v854, %v1074
  %v1076 = vsub.f32 1.0, %v1075
  %v1077 = vmul.f32 %v1074, %v1076
  %v1078 = vadd.f32 %v1074, %v1077
  %vm1079 = vweird.f32 %v854
  %vm1080 = vweird.f32 %v1074
  %vm1081 = vmor %vm1079, %vm1080
  %v1082 = vsel %vm1081, %v1074, %v1078
  %v1083 = vand.u32 2147483647, %v854
  %vm1084 = vcmp.eq.f32.partialorder %v1083, 8.507059e+37
  %v1085 = vand.u32 %v854, 2147483648
  %v1086 = vor.u32 1.1754944e-38, %v1085
  %v1087 = vsel %vm1084, %v1086, %v1082
  %v1088 = vmul.f32 1.0, %v1087
  %v1089 = vrcp.pop %v855
  %v1090 = vmul.f32 %v855, %v1089
  %v1091 = vsub.f32 1.0, %v1090
  %v1092 = vmul.f32 %v1089, %v1091
  %v1093 = vadd.f32 %v1089, %v1092
  %vm1094 = vweird.f32 %v855
  %vm1095 = vweird.f32 %v1089
  %vm1096 = vmor %vm1094, %vm1095
  %v1097 = vsel %vm1096, %v1089, %v1093
  %v1098 = vand.u32 2147483647, %v855
  %vm1099 = vcmp.eq.f32.partialorder %v1098, 8.507059e+37
  %v1100 = vand.u32 %v855, 2147483648
  %v1101 = vor.u32 1.1754944e-38, %v1100
  %v1102 = vsel %vm1099, %v1101, %v1097
  %v1103 = vmul.f32 1.0, %v1102
  %v1104 = vrcp.pop %v856
  %v1105 = vmul.f32 %v856, %v1104
  %v1106 = vsub.f32 1.0, %v1105
  %v1107 = vmul.f32 %v1104, %v1106
  %v1108 = vadd.f32 %v1104, %v1107
  %vm1109 = vweird.f32 %v856
  %vm1110 = vweird.f32 %v1104
  %vm1111 = vmor %vm1109, %vm1110
  %v1112 = vsel %vm1111, %v1104, %v1108
  %v1113 = vand.u32 2147483647, %v856
  %vm1114 = vcmp.eq.f32.partialorder %v1113, 8.507059e+37
  %v1115 = vand.u32 %v856, 2147483648
  %v1116 = vor.u32 1.1754944e-38, %v1115
  %v1117 = vsel %vm1114, %v1116, %v1112
  %v1118 = vmul.f32 1.0, %v1117
  %v1119 = vrcp.pop %v857
  %v1120 = vmul.f32 %v857, %v1119
  %v1121 = vsub.f32 1.0, %v1120
  %v1122 = vmul.f32 %v1119, %v1121
  %v1123 = vadd.f32 %v1119, %v1122
  %vm1124 = vweird.f32 %v857
  %vm1125 = vweird.f32 %v1119
  %vm1126 = vmor %vm1124, %vm1125
  %v1127 = vsel %vm1126, %v1119, %v1123
  %v1128 = vand.u32 2147483647, %v857
  %vm1129 = vcmp.eq.f32.partialorder %v1128, 8.507059e+37
  %v1130 = vand.u32 %v857, 2147483648
  %v1131 = vor.u32 1.1754944e-38, %v1130
  %v1132 = vsel %vm1129, %v1131, %v1127
  %v1133 = vmul.f32 1.0, %v1132
  %v1134 = vrcp.pop %v858
  %v1135 = vmul.f32 %v858, %v1134
  %v1136 = vsub.f32 1.0, %v1135
  %v1137 = vmul.f32 %v1134, %v1136
  %v1138 = vadd.f32 %v1134, %v1137
  %vm1139 = vweird.f32 %v858
  %vm1140 = vweird.f32 %v1134
  %vm1141 = vmor %vm1139, %vm1140
  %v1142 = vsel %vm1141, %v1134, %v1138
  %v1143 = vand.u32 2147483647, %v858
  %vm1144 = vcmp.eq.f32.partialorder %v1143, 8.507059e+37
  %v1145 = vand.u32 %v858, 2147483648
  %v1146 = vor.u32 1.1754944e-38, %v1145
  %v1147 = vsel %vm1144, %v1146, %v1142
  %v1148 = vmul.f32 1.0, %v1147
  %v1149 = vrcp.pop %v859
  %v1150 = vmul.f32 %v859, %v1149
  %v1151 = vsub.f32 1.0, %v1150
  %v1152 = vmul.f32 %v1149, %v1151
  %v1153 = vadd.f32 %v1149, %v1152
  %vm1154 = vweird.f32 %v859
  %vm1155 = vweird.f32 %v1149
  %vm1156 = vmor %vm1154, %vm1155
  %v1157 = vsel %vm1156, %v1149, %v1153
  %v1158 = vand.u32 2147483647, %v859
  %vm1159 = vcmp.eq.f32.partialorder %v1158, 8.507059e+37
  %v1160 = vand.u32 %v859, 2147483648
  %v1161 = vor.u32 1.1754944e-38, %v1160
  %v1162 = vsel %vm1159, %v1161, %v1157
  %v1163 = vmul.f32 1.0, %v1162
  %v1164 = vrcp.pop %v860
  %v1165 = vmul.f32 %v860, %v1164
  %v1166 = vsub.f32 1.0, %v1165
  %v1167 = vmul.f32 %v1164, %v1166
  %v1168 = vadd.f32 %v1164, %v1167
  %vm1169 = vweird.f32 %v860
  %vm1170 = vweird.f32 %v1164
  %vm1171 = vmor %vm1169, %vm1170
  %v1172 = vsel %vm1171, %v1164, %v1168
  %v1173 = vand.u32 2147483647, %v860
  %vm1174 = vcmp.eq.f32.partialorder %v1173, 8.507059e+37
  %v1175 = vand.u32 %v860, 2147483648
  %v1176 = vor.u32 1.1754944e-38, %v1175
  %v1177 = vsel %vm1174, %v1176, %v1172
  %v1178 = vmul.f32 1.0, %v1177
  %v1179 = vrcp.pop %v861
  %v1180 = vmul.f32 %v861, %v1179
  %v1181 = vsub.f32 1.0, %v1180
  %v1182 = vmul.f32 %v1179, %v1181
  %v1183 = vadd.f32 %v1179, %v1182
  %vm1184 = vweird.f32 %v861
  %vm1185 = vweird.f32 %v1179
  %vm1186 = vmor %vm1184, %vm1185
  %v1187 = vsel %vm1186, %v1179, %v1183
  %v1188 = vand.u32 2147483647, %v861
  %vm1189 = vcmp.eq.f32.partialorder %v1188, 8.507059e+37
  %v1190 = vand.u32 %v861, 2147483648
  %v1191 = vor.u32 1.1754944e-38, %v1190
  %v1192 = vsel %vm1189, %v1191, %v1187
  %v1193 = vmul.f32 1.0, %v1192
  %v1194 = vrcp.pop %v862
  %v1195 = vmul.f32 %v862, %v1194
  %v1196 = vsub.f32 1.0, %v1195
  %v1197 = vmul.f32 %v1194, %v1196
  %v1198 = vadd.f32 %v1194, %v1197
  %vm1199 = vweird.f32 %v862
  %vm1200 = vweird.f32 %v1194
  %vm1201 = vmor %vm1199, %vm1200
  %v1202 = vsel %vm1201, %v1194, %v1198
  %v1203 = vand.u32 2147483647, %v862
  %vm1204 = vcmp.eq.f32.partialorder %v1203, 8.507059e+37
  %v1205 = vand.u32 %v862, 2147483648
  %v1206 = vor.u32 1.1754944e-38, %v1205
  %v1207 = vsel %vm1204, %v1206, %v1202
  %v1208 = vmul.f32 1.0, %v1207
  %v1209 = vrcp.pop %v863
  %v1210 = vmul.f32 %v863, %v1209
  %v1211 = vsub.f32 1.0, %v1210
  %v1212 = vmul.f32 %v1209, %v1211
  %v1213 = vadd.f32 %v1209, %v1212
  %vm1214 = vweird.f32 %v863
  %vm1215 = vweird.f32 %v1209
  %vm1216 = vmor %vm1214, %vm1215
  %v1217 = vsel %vm1216, %v1209, %v1213
  %v1218 = vand.u32 2147483647, %v863
  %vm1219 = vcmp.eq.f32.partialorder %v1218, 8.507059e+37
  %v1220 = vand.u32 %v863, 2147483648
  %v1221 = vor.u32 1.1754944e-38, %v1220
  %v1222 = vsel %vm1219, %v1221, %v1217
  %v1223 = vmul.f32 1.0, %v1222
  %v1224 = vrcp.pop %v864
  %v1225 = vmul.f32 %v864, %v1224
  %v1226 = vsub.f32 1.0, %v1225
  %v1227 = vmul.f32 %v1224, %v1226
  %v1228 = vadd.f32 %v1224, %v1227
  %vm1229 = vweird.f32 %v864
  %vm1230 = vweird.f32 %v1224
  %vm1231 = vmor %vm1229, %vm1230
  %v1232 = vsel %vm1231, %v1224, %v1228
  %v1233 = vand.u32 2147483647, %v864
  %vm1234 = vcmp.eq.f32.partialorder %v1233, 8.507059e+37
  %v1235 = vand.u32 %v864, 2147483648
  %v1236 = vor.u32 1.1754944e-38, %v1235
  %v1237 = vsel %vm1234, %v1236, %v1232
  %v1238 = vmul.f32 1.0, %v1237
  %v1239 = vrcp.pop %v865
  %v1240 = vmul.f32 %v865, %v1239
  %v1241 = vsub.f32 1.0, %v1240
  %v1242 = vmul.f32 %v1239, %v1241
  %v1243 = vadd.f32 %v1239, %v1242
  %vm1244 = vweird.f32 %v865
  %vm1245 = vweird.f32 %v1239
  %vm1246 = vmor %vm1244, %vm1245
  %v1247 = vsel %vm1246, %v1239, %v1243
  %v1248 = vand.u32 2147483647, %v865
  %vm1249 = vcmp.eq.f32.partialorder %v1248, 8.507059e+37
  %v1250 = vand.u32 %v865, 2147483648
  %v1251 = vor.u32 1.1754944e-38, %v1250
  %v1252 = vsel %vm1249, %v1251, %v1247
  %v1253 = vmul.f32 1.0, %v1252
  %v1254 = vrcp.pop %v866
  %v1255 = vmul.f32 %v866, %v1254
  %v1256 = vsub.f32 1.0, %v1255
  %v1257 = vmul.f32 %v1254, %v1256
  %v1258 = vadd.f32 %v1254, %v1257
  %vm1259 = vweird.f32 %v866
  %vm1260 = vweird.f32 %v1254
  %vm1261 = vmor %vm1259, %vm1260
  %v1262 = vsel %vm1261, %v1254, %v1258
  %v1263 = vand.u32 2147483647, %v866
  %vm1264 = vcmp.eq.f32.partialorder %v1263, 8.507059e+37
  %v1265 = vand.u32 %v866, 2147483648
  %v1266 = vor.u32 1.1754944e-38, %v1265
  %v1267 = vsel %vm1264, %v1266, %v1262
  %v1268 = vmul.f32 1.0, %v1267
  %v1269 = vrcp.pop %v867
  %v1270 = vmul.f32 %v867, %v1269
  %v1271 = vsub.f32 1.0, %v1270
  %v1272 = vmul.f32 %v1269, %v1271
  %v1273 = vadd.f32 %v1269, %v1272
  %vm1274 = vweird.f32 %v867
  %vm1275 = vweird.f32 %v1269
  %vm1276 = vmor %vm1274, %vm1275
  %v1277 = vsel %vm1276, %v1269, %v1273
  %v1278 = vand.u32 2147483647, %v867
  %vm1279 = vcmp.eq.f32.partialorder %v1278, 8.507059e+37
  %v1280 = vand.u32 %v867, 2147483648
  %v1281 = vor.u32 1.1754944e-38, %v1280
  %v1282 = vsel %vm1279, %v1281, %v1277
  %v1283 = vmul.f32 1.0, %v1282
  %v1284 = vrcp.pop %v868
  %v1285 = vmul.f32 %v868, %v1284
  %v1286 = vsub.f32 1.0, %v1285
  %v1287 = vmul.f32 %v1284, %v1286
  %v1288 = vadd.f32 %v1284, %v1287
  %vm1289 = vweird.f32 %v868
  %vm1290 = vweird.f32 %v1284
  %vm1291 = vmor %vm1289, %vm1290
  %v1292 = vsel %vm1291, %v1284, %v1288
  %v1293 = vand.u32 2147483647, %v868
  %vm1294 = vcmp.eq.f32.partialorder %v1293, 8.507059e+37
  %v1295 = vand.u32 %v868, 2147483648
  %v1296 = vor.u32 1.1754944e-38, %v1295
  %v1297 = vsel %vm1294, %v1296, %v1292
  %v1298 = vmul.f32 1.0, %v1297
  %v1299 = vrcp.pop %v869
  %v1300 = vmul.f32 %v869, %v1299
  %v1301 = vsub.f32 1.0, %v1300
  %v1302 = vmul.f32 %v1299, %v1301
  %v1303 = vadd.f32 %v1299, %v1302
  %vm1304 = vweird.f32 %v869
  %vm1305 = vweird.f32 %v1299
  %vm1306 = vmor %vm1304, %vm1305
  %v1307 = vsel %vm1306, %v1299, %v1303
  %v1308 = vand.u32 2147483647, %v869
  %vm1309 = vcmp.eq.f32.partialorder %v1308, 8.507059e+37
  %v1310 = vand.u32 %v869, 2147483648
  %v1311 = vor.u32 1.1754944e-38, %v1310
  %v1312 = vsel %vm1309, %v1311, %v1307
  %v1313 = vmul.f32 1.0, %v1312
  %v1314 = vrcp.pop %v870
  %v1315 = vmul.f32 %v870, %v1314
  %v1316 = vsub.f32 1.0, %v1315
  %v1317 = vmul.f32 %v1314, %v1316
  %v1318 = vadd.f32 %v1314, %v1317
  %vm1319 = vweird.f32 %v870
  %vm1320 = vweird.f32 %v1314
  %vm1321 = vmor %vm1319, %vm1320
  %v1322 = vsel %vm1321, %v1314, %v1318
  %v1323 = vand.u32 2147483647, %v870
  %vm1324 = vcmp.eq.f32.partialorder %v1323, 8.507059e+37
  %v1325 = vand.u32 %v870, 2147483648
  %v1326 = vor.u32 1.1754944e-38, %v1325
  %v1327 = vsel %vm1324, %v1326, %v1322
  %v1328 = vmul.f32 1.0, %v1327
  %v1329 = vrcp.pop %v871
  %v1330 = vmul.f32 %v871, %v1329
  %v1331 = vsub.f32 1.0, %v1330
  %v1332 = vmul.f32 %v1329, %v1331
  %v1333 = vadd.f32 %v1329, %v1332
  %vm1334 = vweird.f32 %v871
  %vm1335 = vweird.f32 %v1329
  %vm1336 = vmor %vm1334, %vm1335
  %v1337 = vsel %vm1336, %v1329, %v1333
  %v1338 = vand.u32 2147483647, %v871
  %vm1339 = vcmp.eq.f32.partialorder %v1338, 8.507059e+37
  %v1340 = vand.u32 %v871, 2147483648
  %v1341 = vor.u32 1.1754944e-38, %v1340
  %v1342 = vsel %vm1339, %v1341, %v1337
  %v1343 = vmul.f32 1.0, %v1342
  %v1344 = vrcp.pop %v872
  %v1345 = vmul.f32 %v872, %v1344
  %v1346 = vsub.f32 1.0, %v1345
  %v1347 = vmul.f32 %v1344, %v1346
  %v1348 = vadd.f32 %v1344, %v1347
  %vm1349 = vweird.f32 %v872
  %vm1350 = vweird.f32 %v1344
  %vm1351 = vmor %vm1349, %vm1350
  %v1352 = vsel %vm1351, %v1344, %v1348
  %v1353 = vand.u32 2147483647, %v872
  %vm1354 = vcmp.eq.f32.partialorder %v1353, 8.507059e+37
  %v1355 = vand.u32 %v872, 2147483648
  %v1356 = vor.u32 1.1754944e-38, %v1355
  %v1357 = vsel %vm1354, %v1356, %v1352
  %v1358 = vmul.f32 1.0, %v1357
  %v1359 = vrcp.pop %v873
  %v1360 = vmul.f32 %v873, %v1359
  %v1361 = vsub.f32 1.0, %v1360
  %v1362 = vmul.f32 %v1359, %v1361
  %v1363 = vadd.f32 %v1359, %v1362
  %vm1364 = vweird.f32 %v873
  %vm1365 = vweird.f32 %v1359
  %vm1366 = vmor %vm1364, %vm1365
  %v1367 = vsel %vm1366, %v1359, %v1363
  %v1368 = vand.u32 2147483647, %v873
  %vm1369 = vcmp.eq.f32.partialorder %v1368, 8.507059e+37
  %v1370 = vand.u32 %v873, 2147483648
  %v1371 = vor.u32 1.1754944e-38, %v1370
  %v1372 = vsel %vm1369, %v1371, %v1367
  %v1373 = vmul.f32 1.0, %v1372
  %v1374 = vrcp.pop %v874
  %v1375 = vmul.f32 %v874, %v1374
  %v1376 = vsub.f32 1.0, %v1375
  %v1377 = vmul.f32 %v1374, %v1376
  %v1378 = vadd.f32 %v1374, %v1377
  %vm1379 = vweird.f32 %v874
  %vm1380 = vweird.f32 %v1374
  %vm1381 = vmor %vm1379, %vm1380
  %v1382 = vsel %vm1381, %v1374, %v1378
  %v1383 = vand.u32 2147483647, %v874
  %vm1384 = vcmp.eq.f32.partialorder %v1383, 8.507059e+37
  %v1385 = vand.u32 %v874, 2147483648
  %v1386 = vor.u32 1.1754944e-38, %v1385
  %v1387 = vsel %vm1384, %v1386, %v1382
  %v1388 = vmul.f32 1.0, %v1387
  %v1389 = vrcp.pop %v875
  %v1390 = vmul.f32 %v875, %v1389
  %v1391 = vsub.f32 1.0, %v1390
  %v1392 = vmul.f32 %v1389, %v1391
  %v1393 = vadd.f32 %v1389, %v1392
  %vm1394 = vweird.f32 %v875
  %vm1395 = vweird.f32 %v1389
  %vm1396 = vmor %vm1394, %vm1395
  %v1397 = vsel %vm1396, %v1389, %v1393
  %v1398 = vand.u32 2147483647, %v875
  %vm1399 = vcmp.eq.f32.partialorder %v1398, 8.507059e+37
  %v1400 = vand.u32 %v875, 2147483648
  %v1401 = vor.u32 1.1754944e-38, %v1400
  %v1402 = vsel %vm1399, %v1401, %v1397
  %v1403 = vmul.f32 1.0, %v1402
  %v1404 = vrcp.pop %v876
  %v1405 = vmul.f32 %v876, %v1404
  %v1406 = vsub.f32 1.0, %v1405
  %v1407 = vmul.f32 %v1404, %v1406
  %v1408 = vadd.f32 %v1404, %v1407
  %vm1409 = vweird.f32 %v876
  %vm1410 = vweird.f32 %v1404
  %vm1411 = vmor %vm1409, %vm1410
  %v1412 = vsel %vm1411, %v1404, %v1408
  %v1413 = vand.u32 2147483647, %v876
  %vm1414 = vcmp.eq.f32.partialorder %v1413, 8.507059e+37
  %v1415 = vand.u32 %v876, 2147483648
  %v1416 = vor.u32 1.1754944e-38, %v1415
  %v1417 = vsel %vm1414, %v1416, %v1412
  %v1418 = vmul.f32 1.0, %v1417
  %v1419 = vrcp.pop %v877
  %v1420 = vmul.f32 %v877, %v1419
  %v1421 = vsub.f32 1.0, %v1420
  %v1422 = vmul.f32 %v1419, %v1421
  %v1423 = vadd.f32 %v1419, %v1422
  %vm1424 = vweird.f32 %v877
  %vm1425 = vweird.f32 %v1419
  %vm1426 = vmor %vm1424, %vm1425
  %v1427 = vsel %vm1426, %v1419, %v1423
  %v1428 = vand.u32 2147483647, %v877
  %vm1429 = vcmp.eq.f32.partialorder %v1428, 8.507059e+37
  %v1430 = vand.u32 %v877, 2147483648
  %v1431 = vor.u32 1.1754944e-38, %v1430
  %v1432 = vsel %vm1429, %v1431, %v1427
  %v1433 = vmul.f32 1.0, %v1432
  %v1434 = vrcp.pop %v878
  %v1435 = vmul.f32 %v878, %v1434
  %v1436 = vsub.f32 1.0, %v1435
  %v1437 = vmul.f32 %v1434, %v1436
  %v1438 = vadd.f32 %v1434, %v1437
  %vm1439 = vweird.f32 %v878
  %vm1440 = vweird.f32 %v1434
  %vm1441 = vmor %vm1439, %vm1440
  %v1442 = vsel %vm1441, %v1434, %v1438
  %v1443 = vand.u32 2147483647, %v878
  %vm1444 = vcmp.eq.f32.partialorder %v1443, 8.507059e+37
  %v1445 = vand.u32 %v878, 2147483648
  %v1446 = vor.u32 1.1754944e-38, %v1445
  %v1447 = vsel %vm1444, %v1446, %v1442
  %v1448 = vmul.f32 1.0, %v1447
  %vm1449 = vcmask 23552
  %1450 = vst.msk [vmem:[%s7] sm:$0xff] %vm1449, %v893
  %1451 = vst.msk [vmem:[%s7 + $0x8] sm:$0xff] %vm1449, %v908
  %1452 = vst.msk [vmem:[%s7 + $0x10] sm:$0xff] %vm1449, %v923
  %1453 = vst.msk [vmem:[%s7 + $0x18] sm:$0xff] %vm1449, %v938
  %1454 = vst.msk [vmem:[%s7 + $0x20] sm:$0xff] %vm1449, %v953
  %1455 = vst.msk [vmem:[%s7 + $0x28] sm:$0xff] %vm1449, %v968
  %1456 = vst.msk [vmem:[%s7 + $0x30] sm:$0xff] %vm1449, %v983
  %1457 = vst.msk [vmem:[%s7 + $0x38] sm:$0xff] %vm1449, %v998
  %1458 = vst.msk [vmem:[%s7 + $0x40] sm:$0xff] %vm1449, %v1013
  %1459 = vst.msk [vmem:[%s7 + $0x48] sm:$0xff] %vm1449, %v1028
  %1460 = vst.msk [vmem:[%s7 + $0x50] sm:$0xff] %vm1449, %v1043
  %1461 = vst.msk [vmem:[%s7 + $0x58] sm:$0xff] %vm1449, %v1058
  %1462 = vst.msk [vmem:[%s7 + $0x60] sm:$0xff] %vm1449, %v1073
  %1463 = vst.msk [vmem:[%s7 + $0x68] sm:$0xff] %vm1449, %v1088
  %1464 = vst.msk [vmem:[%s7 + $0x70] sm:$0xff] %vm1449, %v1103
  %1465 = vst.msk [vmem:[%s7 + $0x78] sm:$0xff] %vm1449, %v1118
  %1466 = vst.msk [vmem:[%s7 + $0x80] sm:$0xff] %vm1449, %v1133
  %1467 = vst.msk [vmem:[%s7 + $0x88] sm:$0xff] %vm1449, %v1148
  %1468 = vst.msk [vmem:[%s7 + $0x90] sm:$0xff] %vm1449, %v1163
  %1469 = vst.msk [vmem:[%s7 + $0x98] sm:$0xff] %vm1449, %v1178
  %1470 = vst.msk [vmem:[%s7 + $0xa0] sm:$0xff] %vm1449, %v1193
  %1471 = vst.msk [vmem:[%s7 + $0xa8] sm:$0xff] %vm1449, %v1208
  %1472 = vst.msk [vmem:[%s7 + $0xb0] sm:$0xff] %vm1449, %v1223
  %1473 = vst.msk [vmem:[%s7 + $0xb8] sm:$0xff] %vm1449, %v1238
  %1474 = vst.msk [vmem:[%s7 + $0xc0] sm:$0xff] %vm1449, %v1253
  %1475 = vst.msk [vmem:[%s7 + $0xc8] sm:$0xff] %vm1449, %v1268
  %1476 = vst.msk [vmem:[%s7 + $0xd0] sm:$0xff] %vm1449, %v1283
  %1477 = vst.msk [vmem:[%s7 + $0xd8] sm:$0xff] %vm1449, %v1298
  %1478 = vst.msk [vmem:[%s7 + $0xe0] sm:$0xff] %vm1449, %v1313
  %1479 = vst.msk [vmem:[%s7 + $0xe8] sm:$0xff] %vm1449, %v1328
  %1480 = vst.msk [vmem:[%s7 + $0xf0] sm:$0xff] %vm1449, %v1343
  %1481 = vst.msk [vmem:[%s7 + $0xf8] sm:$0xff] %vm1449, %v1358
  %1482 = vst.msk [vmem:[%s7 + $0x100] sm:$0xff] %vm1449, %v1373
  %1483 = vst.msk [vmem:[%s7 + $0x108] sm:$0xff] %vm1449, %v1388
  %1484 = vst.msk [vmem:[%s7 + $0x110] sm:$0xff] %vm1449, %v1403
  %1485 = vst.msk [vmem:[%s7 + $0x118] sm:$0xff] %vm1449, %v1418
  %1486 = vst.msk [vmem:[%s7 + $0x120] sm:$0xff] %vm1449, %v1433
  %1487 = vst.msk [vmem:[%s7 + $0x128] sm:$0xff] %vm1449, %v1448
  // Predicated region
  $region30: #{tpu_custom_call.1} parent=0 // pred_check
    _
  $region31: #{tpu_custom_call.1} parent=0 // pred_check_branch
    %1489 = sbr.rel (0) target = $region33
  $region32: #{tpu_custom_call.1} parent=0 // pred_region
    _
  $region33: #{tpu_custom_call.1} parent=0 // pred_fallthru
    _
  // Predicated region
  $region34: #{tpu_custom_call.1} parent=0 // pred_check
    _
  $region35: #{tpu_custom_call.1} parent=0 // pred_check_branch
    %1491 = sbr.rel (0) target = $region37
  $region36: #{tpu_custom_call.1} parent=0 // pred_region
    _
  $region37: #{tpu_custom_call.1} parent=0 // pred_fallthru
    _

</llo_original>
